<compile_context>
chip_gen: v7x
topology: tpu7x:2x2x1
jax: 0.10.0
libtpu: 0.0.40
codegen_flags: <defaults>
</compile_context>

<pallas_src>
import functools

import jax
import jax.numpy as jnp
from jax.experimental import pallas as pl
from jax.experimental.pallas import tpu as pltpu

# Module hyper-parameters (small-but-consistent choices)
N_EMBD = 384        # matches gpt.py n_embd
HEAD_SIZE = 64
BATCH = 2
SEQ = 8             # T <= block_size (128); causal mask built on the fly

LANE = 128          # TPU lane width


def _head_kernel(x_ref, w_ref, o_ref, *, batch, seq, head_size, hp):
    """Single grid step processes the whole batch.

    x_ref : (B*T, C)   f32  VMEM
    w_ref : (C, 3*HP)  bf16 VMEM  (fused [Wk | Wq | Wv], each zero-padded to HP)
    o_ref : (B*T, HP)  f32  VMEM  (lane-dense; columns >= head_size are zero)
    """
    x = x_ref[...].astype(jnp.bfloat16)                        # (B*T, C)
    w = w_ref[...]                                             # (C, 3*HP) bf16

    # One fused QKV projection for the whole batch (M = B*T, N = 3*HP).
    qkv = jnp.dot(x, w, preferred_element_type=jnp.float32)    # (B*T, 3*HP) f32

    scale = head_size ** -0.5                                  # true head size, not padded

    # Causal mask for a (T, T) score tile (shared across batch elements).
    row = jax.lax.broadcasted_iota(jnp.int32, (seq, seq), 0)
    col = jax.lax.broadcasted_iota(jnp.int32, (seq, seq), 1)
    causal = col <= row

    for b in range(batch):                                     # static unroll (B small)
        r0 = b * seq
        blk = qkv[r0:r0 + seq, :]                              # (T, 3*HP)
        k = blk[:, 0 * hp:1 * hp].astype(jnp.bfloat16)         # (T, HP) — vreg-aligned slice
        q = blk[:, 1 * hp:2 * hp].astype(jnp.bfloat16)
        v = blk[:, 2 * hp:3 * hp].astype(jnp.bfloat16)

        # q @ k^T without materializing a transpose of k.
        wei = jax.lax.dot_general(
            q, k, (((1,), (1,)), ((), ())),
            preferred_element_type=jnp.float32) * scale        # (T, T) f32

        wei = jnp.where(causal, wei, -jnp.inf)

        # Numerically stable softmax (diagonal never masked -> no all -inf row).
        wei = wei - jnp.max(wei, axis=-1, keepdims=True)
        p = jnp.exp(wei)
        p = p * pl.reciprocal(jnp.sum(p, axis=-1, keepdims=True), approx=True)

        # dropout -> identity (eval mode)

        out = jnp.dot(p.astype(jnp.bfloat16), v,
                      preferred_element_type=jnp.float32)      # (T, HP)
        o_ref[r0:r0 + seq, :] = out.astype(o_ref.dtype)


def head_forward(x, w_key, w_query, w_value):
    """x: (B, T, C) float32; weights: (C, H) float32. Returns (B, T, H)."""
    B, T, C = x.shape
    H = w_key.shape[1]
    HP = ((H + LANE - 1) // LANE) * LANE       # head dim padded to lane width

    # Fuse + zero-pad + cast projection weights (one-time preprocessing).
    def pad_w(w):
        return jnp.pad(w, ((0, 0), (0, HP - H)))
    w_qkv = jnp.concatenate(
        [pad_w(w_key), pad_w(w_query), pad_w(w_value)], axis=1
    ).astype(jnp.bfloat16)                     # (C, 3*HP)

    x2 = x.reshape(B * T, C)                   # fold batch into the matmul M dim

    kernel = functools.partial(
        _head_kernel, batch=B, seq=T, head_size=H, hp=HP)

    grid_spec = pltpu.PrefetchScalarGridSpec(
        num_scalar_prefetch=0,
        grid=(1,),                                             # single step: all data in VMEM
        in_specs=[
            pl.BlockSpec((B * T, C), lambda i: (0, 0)),        # x (whole batch)
            pl.BlockSpec((C, 3 * HP), lambda i: (0, 0)),       # fused W_qkv
        ],
        out_specs=pl.BlockSpec((B * T, HP), lambda i: (0, 0)), # lane-dense output slab
    )

    out = pl.pallas_call(
        kernel,
        out_shape=jax.ShapeDtypeStruct((B * T, HP), x.dtype),
        grid_spec=grid_spec,
        compiler_params=pltpu.CompilerParams(
            dimension_semantics=("arbitrary",)),
    )(x2, w_qkv)

    return out[:, :H].reshape(B, T, H)


def head_reference(x, w_key, w_query, w_value):
    """Pure-JAX f32 reference mirroring the PyTorch forward (eval mode)."""
    k = x @ w_key
    q = x @ w_query
    v = x @ w_value
    scale = k.shape[-1] ** -0.5
    wei = jnp.einsum("btd,bsd->bts", q, k) * scale
    T = x.shape[1]
    mask = jnp.tril(jnp.ones((T, T), dtype=bool))
    wei = jnp.where(mask[None, :, :], wei, -jnp.inf)
    wei = jax.nn.softmax(wei, axis=-1)
    return wei @ v


if __name__ == "__main__":
    key = jax.random.PRNGKey(0)
    kx, kk, kq, kv = jax.random.split(key, 4)

    # deterministic "parameters" (nn.Linear-style uniform init, bias=False)
    bound = 1.0 / (N_EMBD ** 0.5)
    w_key = jax.random.uniform(kk, (N_EMBD, HEAD_SIZE), jnp.float32, -bound, bound)
    w_query = jax.random.uniform(kq, (N_EMBD, HEAD_SIZE), jnp.float32, -bound, bound)
    w_value = jax.random.uniform(kv, (N_EMBD, HEAD_SIZE), jnp.float32, -bound, bound)

    x = jax.random.normal(kx, (BATCH, SEQ, N_EMBD), jnp.float32)

    out = head_forward(x, w_key, w_query, w_value)
    out = jax.block_until_ready(out)

    ref = head_reference(x, w_key, w_query, w_value)
    assert out.shape == (BATCH, SEQ, HEAD_SIZE)
    # bf16 matmuls with f32 accumulation -> relaxed tolerance vs f32 reference.
    assert jnp.allclose(out, ref, atol=2e-2, rtol=2e-2)

    print("KERNEL_OK")
</pallas_src>

<mosaic_0001>
module attributes {stable_mosaic.version = 11 : i64} {
  func.func @_head_kernel(%arg0: i32, %arg1: memref<16x384xf32, #tpu.memory_space<vmem>>, %arg2: memref<384x384xbf16, #tpu.memory_space<vmem>>, %arg3: memref<16x128xf32, #tpu.memory_space<vmem>>) attributes {dimension_semantics = [#tpu.dimension_semantics<arbitrary>], iteration_bounds = array<i64: 1>, scalar_prefetch = 0 : i64, scratch_operands = 0 : i64, tpu.core_type = #tpu.core_type<tc>, window_params = [{pipeline_mode = #tpu.pipeline_mode<synchronous>, transform_indices = @transform_0, window_bounds = array<i64: 16, 384>}, {pipeline_mode = #tpu.pipeline_mode<synchronous>, transform_indices = @transform_1, window_bounds = array<i64: 384, 384>}, {pipeline_mode = #tpu.pipeline_mode<synchronous>, transform_indices = @transform_2, window_bounds = array<i64: 16, 128>}]} {
    %c0 = arith.constant 0 : index
    %c0_0 = arith.constant 0 : index
    %0 = vector.load %arg1[%c0, %c0_0] : memref<16x384xf32, #tpu.memory_space<vmem>>, vector<16x384xf32>
    %1 = arith.truncf %0 : vector<16x384xf32> to vector<16x384xbf16>
    %c0_1 = arith.constant 0 : index
    %c0_2 = arith.constant 0 : index
    %2 = vector.load %arg2[%c0_1, %c0_2] : memref<384x384xbf16, #tpu.memory_space<vmem>>, vector<384x384xbf16>
    %cst = arith.constant dense<0.000000e+00> : vector<16x384xf32>
    %3 = tpu.matmul %1, %2, %cst {dimension_numbers = #tpu.dot_dimension_numbers<[1], [0], [0], [1], [0, 0, 1, 1], [], []>} : vector<16x384xbf16>, vector<384x384xbf16>, vector<16x384xf32> -> vector<16x384xf32>
    %4 = tpu.iota {dimensions = array<i32: 0>} : vector<8x8xi32>
    %5 = tpu.iota {dimensions = array<i32: 1>} : vector<8x8xi32>
    %6 = arith.cmpi sle, %5, %4 : vector<8x8xi32>
    %7 = vector.extract_strided_slice %3 {offsets = [0, 0], sizes = [8, 384], strides = [1, 1]} : vector<16x384xf32> to vector<8x384xf32>
    %8 = vector.extract_strided_slice %7 {offsets = [0, 0], sizes = [8, 128], strides = [1, 1]} : vector<8x384xf32> to vector<8x128xf32>
    %9 = arith.truncf %8 : vector<8x128xf32> to vector<8x128xbf16>
    %10 = vector.extract_strided_slice %7 {offsets = [0, 128], sizes = [8, 128], strides = [1, 1]} : vector<8x384xf32> to vector<8x128xf32>
    %11 = arith.truncf %10 : vector<8x128xf32> to vector<8x128xbf16>
    %12 = vector.extract_strided_slice %7 {offsets = [0, 256], sizes = [8, 128], strides = [1, 1]} : vector<8x384xf32> to vector<8x128xf32>
    %13 = arith.truncf %12 : vector<8x128xf32> to vector<8x128xbf16>
    %cst_3 = arith.constant dense<0.000000e+00> : vector<8x8xf32>
    %14 = tpu.matmul %11, %9, %cst_3 {dimension_numbers = #tpu.dot_dimension_numbers<[1], [1], [0], [0], [0, 0, 1, 0], [], []>} : vector<8x128xbf16>, vector<8x128xbf16>, vector<8x8xf32> -> vector<8x8xf32>
    %cst_4 = arith.constant 1.250000e-01 : f32
    %15 = vector.broadcast %cst_4 : f32 to vector<8x8xf32>
    %16 = arith.mulf %14, %15 : vector<8x8xf32>
    %cst_5 = arith.constant 0xFF800000 : f32
    %17 = vector.broadcast %cst_5 : f32 to vector<8x8xf32>
    %18 = arith.select %6, %16, %17 : vector<8x8xi1>, vector<8x8xf32>
    %cst_6 = arith.constant dense<0xFF800000> : vector<8xf32>
    %19 = vector.multi_reduction <maximumf>, %18, %cst_6 [1] : vector<8x8xf32> to vector<8xf32>
    %20 = vector.shape_cast %19 : vector<8xf32> to vector<8x1xf32>
    %21 = vector.broadcast %20 : vector<8x1xf32> to vector<8x8xf32>
    %22 = arith.subf %18, %21 : vector<8x8xf32>
    %23 = math.exp %22 : vector<8x8xf32>
    %cst_7 = arith.constant dense<0.000000e+00> : vector<8xf32>
    %24 = vector.multi_reduction <add>, %23, %cst_7 [1] : vector<8x8xf32> to vector<8xf32>
    %25 = vector.shape_cast %24 : vector<8xf32> to vector<8x1xf32>
    %26 = tpu.reciprocal %25 {approx = true} : vector<8x1xf32> -> vector<8x1xf32>
    %27 = vector.broadcast %26 : vector<8x1xf32> to vector<8x8xf32>
    %28 = arith.mulf %23, %27 : vector<8x8xf32>
    %29 = arith.truncf %28 : vector<8x8xf32> to vector<8x8xbf16>
    %cst_8 = arith.constant dense<0.000000e+00> : vector<8x128xf32>
    %30 = tpu.matmul %29, %13, %cst_8 {dimension_numbers = #tpu.dot_dimension_numbers<[1], [0], [0], [1], [0, 0, 1, 1], [], []>} : vector<8x8xbf16>, vector<8x128xbf16>, vector<8x128xf32> -> vector<8x128xf32>
    %c0_9 = arith.constant 0 : index
    %c0_10 = arith.constant 0 : index
    %31 = vector.load %arg3[%c0_9, %c0_10] : memref<16x128xf32, #tpu.memory_space<vmem>>, vector<8x128xf32>
    tpu.vector_store %arg3[%c0_9, %c0_10], %30 {strides = array<i32>} : memref<16x128xf32, #tpu.memory_space<vmem>>, vector<8x128xf32>,
    %32 = vector.extract_strided_slice %3 {offsets = [8, 0], sizes = [8, 384], strides = [1, 1]} : vector<16x384xf32> to vector<8x384xf32>
    %33 = vector.extract_strided_slice %32 {offsets = [0, 0], sizes = [8, 128], strides = [1, 1]} : vector<8x384xf32> to vector<8x128xf32>
    %34 = arith.truncf %33 : vector<8x128xf32> to vector<8x128xbf16>
    %35 = vector.extract_strided_slice %32 {offsets = [0, 128], sizes = [8, 128], strides = [1, 1]} : vector<8x384xf32> to vector<8x128xf32>
    %36 = arith.truncf %35 : vector<8x128xf32> to vector<8x128xbf16>
    %37 = vector.extract_strided_slice %32 {offsets = [0, 256], sizes = [8, 128], strides = [1, 1]} : vector<8x384xf32> to vector<8x128xf32>
    %38 = arith.truncf %37 : vector<8x128xf32> to vector<8x128xbf16>
    %cst_11 = arith.constant dense<0.000000e+00> : vector<8x8xf32>
    %39 = tpu.matmul %36, %34, %cst_11 {dimension_numbers = #tpu.dot_dimension_numbers<[1], [1], [0], [0], [0, 0, 1, 0], [], []>} : vector<8x128xbf16>, vector<8x128xbf16>, vector<8x8xf32> -> vector<8x8xf32>
    %cst_12 = arith.constant 1.250000e-01 : f32
    %40 = vector.broadcast %cst_12 : f32 to vector<8x8xf32>
    %41 = arith.mulf %39, %40 : vector<8x8xf32>
    %cst_13 = arith.constant 0xFF800000 : f32
    %42 = vector.broadcast %cst_13 : f32 to vector<8x8xf32>
    %43 = arith.select %6, %41, %42 : vector<8x8xi1>, vector<8x8xf32>
    %cst_14 = arith.constant dense<0xFF800000> : vector<8xf32>
    %44 = vector.multi_reduction <maximumf>, %43, %cst_14 [1] : vector<8x8xf32> to vector<8xf32>
    %45 = vector.shape_cast %44 : vector<8xf32> to vector<8x1xf32>
    %46 = vector.broadcast %45 : vector<8x1xf32> to vector<8x8xf32>
    %47 = arith.subf %43, %46 : vector<8x8xf32>
    %48 = math.exp %47 : vector<8x8xf32>
    %cst_15 = arith.constant dense<0.000000e+00> : vector<8xf32>
    %49 = vector.multi_reduction <add>, %48, %cst_15 [1] : vector<8x8xf32> to vector<8xf32>
    %50 = vector.shape_cast %49 : vector<8xf32> to vector<8x1xf32>
    %51 = tpu.reciprocal %50 {approx = true} : vector<8x1xf32> -> vector<8x1xf32>
    %52 = vector.broadcast %51 : vector<8x1xf32> to vector<8x8xf32>
    %53 = arith.mulf %48, %52 : vector<8x8xf32>
    %54 = arith.truncf %53 : vector<8x8xf32> to vector<8x8xbf16>
    %cst_16 = arith.constant dense<0.000000e+00> : vector<8x128xf32>
    %55 = tpu.matmul %54, %38, %cst_16 {dimension_numbers = #tpu.dot_dimension_numbers<[1], [0], [0], [1], [0, 0, 1, 1], [], []>} : vector<8x8xbf16>, vector<8x128xbf16>, vector<8x128xf32> -> vector<8x128xf32>
    %c8 = arith.constant 8 : index
    %c0_17 = arith.constant 0 : index
    %56 = vector.load %arg3[%c8, %c0_17] : memref<16x128xf32, #tpu.memory_space<vmem>>, vector<8x128xf32>
    tpu.vector_store %arg3[%c8, %c0_17], %55 {strides = array<i32>} : memref<16x128xf32, #tpu.memory_space<vmem>>, vector<8x128xf32>,
    return
  }
  func.func @transform_0(%arg0: i32) -> (i32, i32) {
    %c0_i32 = arith.constant 0 : i32
    %c0_i32_0 = arith.constant 0 : i32
    %c0_i32_1 = arith.constant 0 : i32
    return %c0_i32, %c0_i32_0 : i32, i32
  }
  func.func @transform_1(%arg0: i32) -> (i32, i32) {
    %c0_i32 = arith.constant 0 : i32
    %c0_i32_0 = arith.constant 0 : i32
    %c0_i32_1 = arith.constant 0 : i32
    return %c0_i32, %c0_i32_0 : i32, i32
  }
  func.func @transform_2(%arg0: i32) -> (i32, i32) {
    %c0_i32 = arith.constant 0 : i32
    %c0_i32_0 = arith.constant 0 : i32
    %c0_i32_1 = arith.constant 0 : i32
    return %c0_i32, %c0_i32_0 : i32, i32
  }
}

</mosaic_0001>

<llo_original>
// kernel: tpu_custom_call.1
$region0: #{tpu_custom_call.1}
  #allocation0 [shape = 'u32[]', space=smem, size = 0x4, offset = 0x4, fixed_abs, tag = 'smem constant byte address 0x4 - core index']
  #allocation1 [shape = 'u32[144,128]{1,0:T(1,128)}', space=vmem, size = 0x12000, scoped, tag = 'internal scratch']
  %s0 = inlined_call_operand.hbm [shape: f32[16,384], index: 0, kind: input, shape index: {}]
  %s1 = inlined_call_operand.hbm [shape: bf16[384,384], index: 1, kind: input, shape index: {}]
  %s2 = inlined_call_operand.hbm [shape: f32[16,128], index: 2, kind: output, shape index: {}]
  %s3 = sld [smem:[#allocation0]]
  $region26: #{tpu_custom_call.1} parent=0
    _
  %s5 = ssub.s32 1, %s3
  %s6 = scalar_select 0, %s5, %s3
  $region1: #{tpu_custom_call.1} parent=0
    #allocation2 [shape = 'u8[24576]{0}', space=vmem, size = 0x6000, scoped, tag = 'input window, operand 0, single buffered']
    #allocation3 [shape = 's32[1]{0}', space=sflag, size = 0x4, scoped, tag = 'scoped memory for tpu_custom_call.1']
    #allocation4 [shape = 's32[1]{0}', space=sflag, size = 0x4, scoped, tag = 'scoped memory for tpu_custom_call.1']
    #allocation5 [shape = 'u8[294912]{0}', space=vmem, size = 0x48000, scoped, tag = 'input window, operand 1, single buffered']
    #allocation6 [shape = 's32[1]{0}', space=sflag, size = 0x4, scoped, tag = 'scoped memory for tpu_custom_call.1']
    #allocation7 [shape = 'u8[8192]{0}', space=vmem, size = 0x2000, scoped, tag = 'output window, operand 0, single buffered']
    %7 = vsyncpa [#allocation3], 0
    %8 = vsyncpa [#allocation6], 0
    %9 = vsyncpa [#allocation4], 0
    // Predicated region
    $region2: #{tpu_custom_call.1} parent=1 // pred_check
      _
    $region3: #{tpu_custom_call.1} parent=1 // pred_check_branch
      %11 = sbr.rel (0) target = $region5
    $region4: #{tpu_custom_call.1} parent=1 // pred_region
      %s13 = ssub.s32 768, 768
      %14 = vsyncadd [#allocation3], %s13
      %s15 = sshll.u32 [#allocation2], 4
      %s16 = int_to_ptr.vmem [resolvable:$true] %s15
      %21 = dma.hbm_to_vmem [thread:$0]  %s0, 768, %s16, [#allocation3], 384, 384, 24
    $region5: #{tpu_custom_call.1} parent=1 // pred_fallthru
      _
    // Predicated region
    $region6: #{tpu_custom_call.1} parent=1 // pred_check
      _
    $region7: #{tpu_custom_call.1} parent=1 // pred_check_branch
      %23 = sbr.rel (0) target = $region9
    $region8: #{tpu_custom_call.1} parent=1 // pred_region
      %s25 = ssub.s32 9216, 9216
      %26 = vsyncadd [#allocation6], %s25
      %s27 = sshll.u32 [#allocation5], 4
      %s28 = int_to_ptr.vmem [resolvable:$true] %s27
      %33 = dma.hbm_to_vmem [thread:$0]  %s1, 9216, %s28, [#allocation6], 192, 192, 12
    $region9: #{tpu_custom_call.1} parent=1 // pred_fallthru
      _
    // Predicated region
    $region10: #{tpu_custom_call.1} parent=1 // pred_check
      _
    $region11: #{tpu_custom_call.1} parent=1 // pred_check_branch
      %35 = sbr.rel (0) target = $region13
    $region12: #{tpu_custom_call.1} parent=1 // pred_region
      %36 = dma.done [#allocation3], 768
    $region13: #{tpu_custom_call.1} parent=1 // pred_fallthru
      _
    // Predicated region
    $region14: #{tpu_custom_call.1} parent=1 // pred_check
      _
    $region15: #{tpu_custom_call.1} parent=1 // pred_check_branch
      %38 = sbr.rel (0) target = $region17
    $region16: #{tpu_custom_call.1} parent=1 // pred_region
      %39 = dma.done [#allocation6], 9216
    $region17: #{tpu_custom_call.1} parent=1 // pred_fallthru
      _
    %v41 = vld [vmem:[#allocation2] sm:$0xff]
    %v42 = vld [vmem:[#allocation2 + $0x8] sm:$0xff]
    %v43 = vld [vmem:[#allocation2 + $0x10] sm:$0xff]
    %v44 = vld [vmem:[#allocation2 + $0x18] sm:$0xff]
    %v45 = vld [vmem:[#allocation2 + $0x20] sm:$0xff]
    %v46 = vld [vmem:[#allocation2 + $0x28] sm:$0xff]
    %v47 = vpack.c.bf16 %v44, %v41
    %v48 = vpack.c.bf16 %v45, %v42
    %v49 = vpack.c.bf16 %v46, %v43
    %v50 = vld [vmem:[#allocation5] sm:$0xff]
    %v51 = vld [vmem:[#allocation5 + $0x8] sm:$0xf]
    %v52 = vld [vmem:[#allocation5 + $0xc] sm:$0xff]
    %v53 = vld [vmem:[#allocation5 + $0x14] sm:$0xf]
    %v54 = vld [vmem:[#allocation5 + $0x18] sm:$0xff]
    %v55 = vld [vmem:[#allocation5 + $0x20] sm:$0xf]
    %v56 = vld [vmem:[#allocation5 + $0x24] sm:$0xff]
    %v57 = vld [vmem:[#allocation5 + $0x2c] sm:$0xf]
    %v58 = vld [vmem:[#allocation5 + $0x30] sm:$0xff]
    %v59 = vld [vmem:[#allocation5 + $0x38] sm:$0xf]
    %v60 = vld [vmem:[#allocation5 + $0x3c] sm:$0xff]
    %v61 = vld [vmem:[#allocation5 + $0x44] sm:$0xf]
    %v62 = vld [vmem:[#allocation5 + $0x48] sm:$0xff]
    %v63 = vld [vmem:[#allocation5 + $0x50] sm:$0xf]
    %v64 = vld [vmem:[#allocation5 + $0x54] sm:$0xff]
    %v65 = vld [vmem:[#allocation5 + $0x5c] sm:$0xf]
    %v66 = vld [vmem:[#allocation5 + $0x60] sm:$0xff]
    %v67 = vld [vmem:[#allocation5 + $0x68] sm:$0xf]
    %v68 = vld [vmem:[#allocation5 + $0x6c] sm:$0xff]
    %v69 = vld [vmem:[#allocation5 + $0x74] sm:$0xf]
    %v70 = vld [vmem:[#allocation5 + $0x78] sm:$0xff]
    %v71 = vld [vmem:[#allocation5 + $0x80] sm:$0xf]
    %v72 = vld [vmem:[#allocation5 + $0x84] sm:$0xff]
    %v73 = vld [vmem:[#allocation5 + $0x8c] sm:$0xf]
    %v74 = vld [vmem:[#allocation5 + $0x90] sm:$0xff]
    %v75 = vld [vmem:[#allocation5 + $0x98] sm:$0xf]
    %v76 = vld [vmem:[#allocation5 + $0x9c] sm:$0xff]
    %v77 = vld [vmem:[#allocation5 + $0xa4] sm:$0xf]
    %v78 = vld [vmem:[#allocation5 + $0xa8] sm:$0xff]
    %v79 = vld [vmem:[#allocation5 + $0xb0] sm:$0xf]
    %v80 = vld [vmem:[#allocation5 + $0xb4] sm:$0xff]
    %v81 = vld [vmem:[#allocation5 + $0xbc] sm:$0xf]
    %v82 = vld [vmem:[#allocation5 + $0xc0] sm:$0xff]
    %v83 = vld [vmem:[#allocation5 + $0xc8] sm:$0xf]
    %v84 = vld [vmem:[#allocation5 + $0xcc] sm:$0xff]
    %v85 = vld [vmem:[#allocation5 + $0xd4] sm:$0xf]
    %v86 = vld [vmem:[#allocation5 + $0xd8] sm:$0xff]
    %v87 = vld [vmem:[#allocation5 + $0xe0] sm:$0xf]
    %v88 = vld [vmem:[#allocation5 + $0xe4] sm:$0xff]
    %v89 = vld [vmem:[#allocation5 + $0xec] sm:$0xf]
    %v90 = vld [vmem:[#allocation5 + $0xf0] sm:$0xff]
    %v91 = vld [vmem:[#allocation5 + $0xf8] sm:$0xf]
    %v92 = vld [vmem:[#allocation5 + $0xfc] sm:$0xff]
    %v93 = vld [vmem:[#allocation5 + $0x104] sm:$0xf]
    %v94 = vld [vmem:[#allocation5 + $0x108] sm:$0xff]
    %v95 = vld [vmem:[#allocation5 + $0x110] sm:$0xf]
    %v96 = vld [vmem:[#allocation5 + $0x114] sm:$0xff]
    %v97 = vld [vmem:[#allocation5 + $0x11c] sm:$0xf]
    %v98 = vld [vmem:[#allocation5 + $0x120] sm:$0xff]
    %v99 = vld [vmem:[#allocation5 + $0x128] sm:$0xf]
    %v100 = vld [vmem:[#allocation5 + $0x12c] sm:$0xff]
    %v101 = vld [vmem:[#allocation5 + $0x134] sm:$0xf]
    %v102 = vld [vmem:[#allocation5 + $0x138] sm:$0xff]
    %v103 = vld [vmem:[#allocation5 + $0x140] sm:$0xf]
    %v104 = vld [vmem:[#allocation5 + $0x144] sm:$0xff]
    %v105 = vld [vmem:[#allocation5 + $0x14c] sm:$0xf]
    %v106 = vld [vmem:[#allocation5 + $0x150] sm:$0xff]
    %v107 = vld [vmem:[#allocation5 + $0x158] sm:$0xf]
    %v108 = vld [vmem:[#allocation5 + $0x15c] sm:$0xff]
    %v109 = vld [vmem:[#allocation5 + $0x164] sm:$0xf]
    %v110 = vld [vmem:[#allocation5 + $0x168] sm:$0xff]
    %v111 = vld [vmem:[#allocation5 + $0x170] sm:$0xf]
    %v112 = vld [vmem:[#allocation5 + $0x174] sm:$0xff]
    %v113 = vld [vmem:[#allocation5 + $0x17c] sm:$0xf]
    %v114 = vld [vmem:[#allocation5 + $0x180] sm:$0xff]
    %v115 = vld [vmem:[#allocation5 + $0x188] sm:$0xf]
    %v116 = vld [vmem:[#allocation5 + $0x18c] sm:$0xff]
    %v117 = vld [vmem:[#allocation5 + $0x194] sm:$0xf]
    %v118 = vld [vmem:[#allocation5 + $0x198] sm:$0xff]
    %v119 = vld [vmem:[#allocation5 + $0x1a0] sm:$0xf]
    %v120 = vld [vmem:[#allocation5 + $0x1a4] sm:$0xff]
    %v121 = vld [vmem:[#allocation5 + $0x1ac] sm:$0xf]
    %v122 = vld [vmem:[#allocation5 + $0x1b0] sm:$0xff]
    %v123 = vld [vmem:[#allocation5 + $0x1b8] sm:$0xf]
    %v124 = vld [vmem:[#allocation5 + $0x1bc] sm:$0xff]
    %v125 = vld [vmem:[#allocation5 + $0x1c4] sm:$0xf]
    %v126 = vld [vmem:[#allocation5 + $0x1c8] sm:$0xff]
    %v127 = vld [vmem:[#allocation5 + $0x1d0] sm:$0xf]
    %v128 = vld [vmem:[#allocation5 + $0x1d4] sm:$0xff]
    %v129 = vld [vmem:[#allocation5 + $0x1dc] sm:$0xf]
    %v130 = vld [vmem:[#allocation5 + $0x1e0] sm:$0xff]
    %v131 = vld [vmem:[#allocation5 + $0x1e8] sm:$0xf]
    %v132 = vld [vmem:[#allocation5 + $0x1ec] sm:$0xff]
    %v133 = vld [vmem:[#allocation5 + $0x1f4] sm:$0xf]
    %v134 = vld [vmem:[#allocation5 + $0x1f8] sm:$0xff]
    %v135 = vld [vmem:[#allocation5 + $0x200] sm:$0xf]
    %v136 = vld [vmem:[#allocation5 + $0x204] sm:$0xff]
    %v137 = vld [vmem:[#allocation5 + $0x20c] sm:$0xf]
    %v138 = vld [vmem:[#allocation5 + $0x210] sm:$0xff]
    %v139 = vld [vmem:[#allocation5 + $0x218] sm:$0xf]
    %v140 = vld [vmem:[#allocation5 + $0x21c] sm:$0xff]
    %v141 = vld [vmem:[#allocation5 + $0x224] sm:$0xf]
    %v142 = vld [vmem:[#allocation5 + $0x228] sm:$0xff]
    %v143 = vld [vmem:[#allocation5 + $0x230] sm:$0xf]
    %v144 = vld [vmem:[#allocation5 + $0x234] sm:$0xff]
    %v145 = vld [vmem:[#allocation5 + $0x23c] sm:$0xf]
    %v242 = vunpack.c.l.b16 %v50
    %v243 = vunpack.c.h.b16 %v50
    %v244 = vunpack.c.l.b16 %v51
    %v245 = vunpack.c.l.b16 %v52
    %v246 = vunpack.c.h.b16 %v52
    %v247 = vunpack.c.l.b16 %v53
    %v248 = vunpack.c.l.b16 %v54
    %v249 = vunpack.c.h.b16 %v54
    %v250 = vunpack.c.l.b16 %v55
    %v251 = vunpack.c.l.b16 %v56
    %v252 = vunpack.c.h.b16 %v56
    %v253 = vunpack.c.l.b16 %v57
    %v254 = vunpack.c.l.b16 %v58
    %v255 = vunpack.c.h.b16 %v58
    %v256 = vunpack.c.l.b16 %v59
    %v257 = vunpack.c.l.b16 %v60
    %v258 = vunpack.c.h.b16 %v60
    %v259 = vunpack.c.l.b16 %v61
    %v260 = vunpack.c.l.b16 %v62
    %v261 = vunpack.c.h.b16 %v62
    %v262 = vunpack.c.l.b16 %v63
    %v263 = vunpack.c.l.b16 %v64
    %v264 = vunpack.c.h.b16 %v64
    %v265 = vunpack.c.l.b16 %v65
    %v266 = vunpack.c.l.b16 %v66
    %v267 = vunpack.c.h.b16 %v66
    %v268 = vunpack.c.l.b16 %v67
    %v269 = vunpack.c.l.b16 %v68
    %v270 = vunpack.c.h.b16 %v68
    %v271 = vunpack.c.l.b16 %v69
    %v272 = vunpack.c.l.b16 %v70
    %v273 = vunpack.c.h.b16 %v70
    %v274 = vunpack.c.l.b16 %v71
    %v275 = vunpack.c.l.b16 %v72
    %v276 = vunpack.c.h.b16 %v72
    %v277 = vunpack.c.l.b16 %v73
    %v278 = vunpack.c.l.b16 %v74
    %v279 = vunpack.c.h.b16 %v74
    %v280 = vunpack.c.l.b16 %v75
    %v281 = vunpack.c.l.b16 %v76
    %v282 = vunpack.c.h.b16 %v76
    %v283 = vunpack.c.l.b16 %v77
    %v284 = vunpack.c.l.b16 %v78
    %v285 = vunpack.c.h.b16 %v78
    %v286 = vunpack.c.l.b16 %v79
    %v287 = vunpack.c.l.b16 %v80
    %v288 = vunpack.c.h.b16 %v80
    %v289 = vunpack.c.l.b16 %v81
    %v290 = vunpack.c.l.b16 %v82
    %v291 = vunpack.c.h.b16 %v82
    %v292 = vunpack.c.l.b16 %v83
    %v293 = vunpack.c.l.b16 %v84
    %v294 = vunpack.c.h.b16 %v84
    %v295 = vunpack.c.l.b16 %v85
    %v296 = vunpack.c.l.b16 %v86
    %v297 = vunpack.c.h.b16 %v86
    %v298 = vunpack.c.l.b16 %v87
    %v299 = vunpack.c.l.b16 %v88
    %v300 = vunpack.c.h.b16 %v88
    %v301 = vunpack.c.l.b16 %v89
    %v302 = vunpack.c.l.b16 %v90
    %v303 = vunpack.c.h.b16 %v90
    %v304 = vunpack.c.l.b16 %v91
    %v305 = vunpack.c.l.b16 %v92
    %v306 = vunpack.c.h.b16 %v92
    %v307 = vunpack.c.l.b16 %v93
    %v308 = vunpack.c.l.b16 %v94
    %v309 = vunpack.c.h.b16 %v94
    %v310 = vunpack.c.l.b16 %v95
    %v311 = vunpack.c.l.b16 %v96
    %v312 = vunpack.c.h.b16 %v96
    %v313 = vunpack.c.l.b16 %v97
    %v314 = vunpack.c.l.b16 %v98
    %v315 = vunpack.c.h.b16 %v98
    %v316 = vunpack.c.l.b16 %v99
    %v317 = vunpack.c.l.b16 %v100
    %v318 = vunpack.c.h.b16 %v100
    %v319 = vunpack.c.l.b16 %v101
    %v320 = vunpack.c.l.b16 %v102
    %v321 = vunpack.c.h.b16 %v102
    %v322 = vunpack.c.l.b16 %v103
    %v323 = vunpack.c.l.b16 %v104
    %v324 = vunpack.c.h.b16 %v104
    %v325 = vunpack.c.l.b16 %v105
    %v326 = vunpack.c.l.b16 %v106
    %v327 = vunpack.c.h.b16 %v106
    %v328 = vunpack.c.l.b16 %v107
    %v329 = vunpack.c.l.b16 %v108
    %v330 = vunpack.c.h.b16 %v108
    %v331 = vunpack.c.l.b16 %v109
    %v332 = vunpack.c.l.b16 %v110
    %v333 = vunpack.c.h.b16 %v110
    %v334 = vunpack.c.l.b16 %v111
    %v335 = vunpack.c.l.b16 %v112
    %v336 = vunpack.c.h.b16 %v112
    %v337 = vunpack.c.l.b16 %v113
    %v338 = vunpack.c.l.b16 %v114
    %v339 = vunpack.c.h.b16 %v114
    %v340 = vunpack.c.l.b16 %v115
    %v341 = vunpack.c.l.b16 %v116
    %v342 = vunpack.c.h.b16 %v116
    %v343 = vunpack.c.l.b16 %v117
    %v344 = vunpack.c.l.b16 %v118
    %v345 = vunpack.c.h.b16 %v118
    %v346 = vunpack.c.l.b16 %v119
    %v347 = vunpack.c.l.b16 %v120
    %v348 = vunpack.c.h.b16 %v120
    %v349 = vunpack.c.l.b16 %v121
    %v350 = vunpack.c.l.b16 %v122
    %v351 = vunpack.c.h.b16 %v122
    %v352 = vunpack.c.l.b16 %v123
    %v353 = vunpack.c.l.b16 %v124
    %v354 = vunpack.c.h.b16 %v124
    %v355 = vunpack.c.l.b16 %v125
    %v356 = vunpack.c.l.b16 %v126
    %v357 = vunpack.c.h.b16 %v126
    %v358 = vunpack.c.l.b16 %v127
    %v359 = vunpack.c.l.b16 %v128
    %v360 = vunpack.c.h.b16 %v128
    %v361 = vunpack.c.l.b16 %v129
    %v362 = vunpack.c.l.b16 %v130
    %v363 = vunpack.c.h.b16 %v130
    %v364 = vunpack.c.l.b16 %v131
    %v365 = vunpack.c.l.b16 %v132
    %v366 = vunpack.c.h.b16 %v132
    %v367 = vunpack.c.l.b16 %v133
    %v368 = vunpack.c.l.b16 %v134
    %v369 = vunpack.c.h.b16 %v134
    %v370 = vunpack.c.l.b16 %v135
    %v371 = vunpack.c.l.b16 %v136
    %v372 = vunpack.c.h.b16 %v136
    %v373 = vunpack.c.l.b16 %v137
    %v374 = vunpack.c.l.b16 %v138
    %v375 = vunpack.c.h.b16 %v138
    %v376 = vunpack.c.l.b16 %v139
    %v377 = vunpack.c.l.b16 %v140
    %v378 = vunpack.c.h.b16 %v140
    %v379 = vunpack.c.l.b16 %v141
    %v380 = vunpack.c.l.b16 %v142
    %v381 = vunpack.c.h.b16 %v142
    %v382 = vunpack.c.l.b16 %v143
    %v383 = vunpack.c.l.b16 %v144
    %v384 = vunpack.c.h.b16 %v144
    %v385 = vunpack.c.l.b16 %v145
    %v386 = vpack.c.b16 %v245, %v242
    %v387 = vpack.c.b16 %v246, %v243
    %v388 = vpack.c.b16 %v247, %v244
    %v389 = vpack.c.b16 %v251, %v248
    %v390 = vpack.c.b16 %v252, %v249
    %v391 = vpack.c.b16 %v253, %v250
    %v392 = vpack.c.b16 %v257, %v254
    %v393 = vpack.c.b16 %v258, %v255
    %v394 = vpack.c.b16 %v259, %v256
    %v395 = vpack.c.b16 %v263, %v260
    %v396 = vpack.c.b16 %v264, %v261
    %v397 = vpack.c.b16 %v265, %v262
    %v398 = vpack.c.b16 %v269, %v266
    %v399 = vpack.c.b16 %v270, %v267
    %v400 = vpack.c.b16 %v271, %v268
    %v401 = vpack.c.b16 %v275, %v272
    %v402 = vpack.c.b16 %v276, %v273
    %v403 = vpack.c.b16 %v277, %v274
    %v404 = vpack.c.b16 %v281, %v278
    %v405 = vpack.c.b16 %v282, %v279
    %v406 = vpack.c.b16 %v283, %v280
    %v407 = vpack.c.b16 %v287, %v284
    %v408 = vpack.c.b16 %v288, %v285
    %v409 = vpack.c.b16 %v289, %v286
    %v410 = vpack.c.b16 %v293, %v290
    %v411 = vpack.c.b16 %v294, %v291
    %v412 = vpack.c.b16 %v295, %v292
    %v413 = vpack.c.b16 %v299, %v296
    %v414 = vpack.c.b16 %v300, %v297
    %v415 = vpack.c.b16 %v301, %v298
    %v416 = vpack.c.b16 %v305, %v302
    %v417 = vpack.c.b16 %v306, %v303
    %v418 = vpack.c.b16 %v307, %v304
    %v419 = vpack.c.b16 %v311, %v308
    %v420 = vpack.c.b16 %v312, %v309
    %v421 = vpack.c.b16 %v313, %v310
    %v422 = vpack.c.b16 %v317, %v314
    %v423 = vpack.c.b16 %v318, %v315
    %v424 = vpack.c.b16 %v319, %v316
    %v425 = vpack.c.b16 %v323, %v320
    %v426 = vpack.c.b16 %v324, %v321
    %v427 = vpack.c.b16 %v325, %v322
    %v428 = vpack.c.b16 %v329, %v326
    %v429 = vpack.c.b16 %v330, %v327
    %v430 = vpack.c.b16 %v331, %v328
    %v431 = vpack.c.b16 %v335, %v332
    %v432 = vpack.c.b16 %v336, %v333
    %v433 = vpack.c.b16 %v337, %v334
    %v434 = vpack.c.b16 %v341, %v338
    %v435 = vpack.c.b16 %v342, %v339
    %v436 = vpack.c.b16 %v343, %v340
    %v437 = vpack.c.b16 %v347, %v344
    %v438 = vpack.c.b16 %v348, %v345
    %v439 = vpack.c.b16 %v349, %v346
    %v440 = vpack.c.b16 %v353, %v350
    %v441 = vpack.c.b16 %v354, %v351
    %v442 = vpack.c.b16 %v355, %v352
    %v443 = vpack.c.b16 %v359, %v356
    %v444 = vpack.c.b16 %v360, %v357
    %v445 = vpack.c.b16 %v361, %v358
    %v446 = vpack.c.b16 %v365, %v362
    %v447 = vpack.c.b16 %v366, %v363
    %v448 = vpack.c.b16 %v367, %v364
    %v449 = vpack.c.b16 %v371, %v368
    %v450 = vpack.c.b16 %v372, %v369
    %v451 = vpack.c.b16 %v373, %v370
    %v452 = vpack.c.b16 %v377, %v374
    %v453 = vpack.c.b16 %v378, %v375
    %v454 = vpack.c.b16 %v379, %v376
    %v455 = vpack.c.b16 %v383, %v380
    %v456 = vpack.c.b16 %v384, %v381
    %v457 = vpack.c.b16 %v385, %v382
    %530 = vmatprep.subr.bf16.mxu0 %v387
    %531 = vmatpush1.bf16.msra.mxu0 %v386
    %532 = vmatprep.subr.bf16.mxu0 %v390
    %533 = vmatpush1.bf16.msra.mxu0 %v389
    %534 = vmatprep.subr.bf16.mxu0 %v393
    %535 = vmatpush1.bf16.msra.mxu0 %v392
    %536 = vmatprep.subr.bf16.mxu0 %v396
    %537 = vmatpush1.bf16.msra.mxu0 %v395
    %538 = vmatprep.subr.bf16.mxu0 %v399
    %539 = vmatpush1.bf16.msra.mxu0 %v398
    %540 = vmatprep.subr.bf16.mxu0 %v402
    %541 = vmatpush1.bf16.msra.mxu0 %v401
    %542 = vmatprep.subr.bf16.mxu0 %v405
    %543 = vmatpush1.bf16.msra.mxu0 %v404
    %544 = vmatprep.subr.bf16.mxu0 %v408
    %545 = vmatpush1.bf16.msra.mxu0 %v407
    %546 = vmatprep.subr.bf16.mxu0 %v411
    %547 = vmatpush1.bf16.msra.mxu0 %v410
    %548 = vmatprep.subr.bf16.mxu0 %v414
    %549 = vmatpush1.bf16.msra.mxu0 %v413
    %550 = vmatprep.subr.bf16.mxu0 %v417
    %551 = vmatpush1.bf16.msra.mxu0 %v416
    %552 = vmatprep.subr.bf16.mxu0 %v420
    %553 = vmatpush1.bf16.msra.mxu0 %v419
    %554 = vmatprep.subr.bf16.mxu0 %v423
    %555 = vmatpush1.bf16.msra.mxu0 %v422
    %556 = vmatprep.subr.bf16.mxu0 %v426
    %557 = vmatpush1.bf16.msra.mxu0 %v425
    %558 = vmatprep.subr.bf16.mxu0 %v429
    %559 = vmatpush1.bf16.msra.mxu0 %v428
    %560 = vmatprep.subr.bf16.mxu0 %v432
    %561 = vmatpush1.bf16.msra.mxu0 %v431
    %562 = vmatprep.mubr.bf16.mxu0 %v48
    %563 = vmatmul.mubr.bf16.gmra.mrb[0].mxu0 %v47
    %v564 = vpop.f32.mrb[0].mxu0
    %v565 = vadd.f32 0.0, %v564
    %v566 = vpop.f32.mrb[0].mxu0
    %v567 = vadd.f32 0.0, %v566
    %v568 = vpop.f32.mrb[0].mxu0
    %v569 = vadd.f32 0.0, %v568
    %v570 = vpop.f32.mrb[0].mxu0
    %v571 = vadd.f32 0.0, %v570
    %572 = vdwg.mxu0
    %573 = vmatprep.subr.bf16.mxu0 %v435
    %574 = vmatpush1.bf16.msra.mxu0 %v434
    %575 = vmatprep.subr.bf16.mxu0 %v438
    %576 = vmatpush1.bf16.msra.mxu0 %v437
    %577 = vmatprep.subr.bf16.mxu0 %v441
    %578 = vmatpush1.bf16.msra.mxu0 %v440
    %579 = vmatprep.subr.bf16.mxu0 %v444
    %580 = vmatpush1.bf16.msra.mxu0 %v443
    %581 = vmatprep.subr.bf16.mxu0 %v447
    %582 = vmatpush1.bf16.msra.mxu0 %v446
    %583 = vmatprep.subr.bf16.mxu0 %v450
    %584 = vmatpush1.bf16.msra.mxu0 %v449
    %585 = vmatprep.subr.bf16.mxu0 %v453
    %586 = vmatpush1.bf16.msra.mxu0 %v452
    %587 = vmatprep.subr.bf16.mxu0 %v456
    %588 = vmatpush1.bf16.msra.mxu0 %v455
    %589 = vmatprep.subr.bf16.mxu0 0
    %590 = vmatpush1.bf16.msra.mxu0 0
    %591 = vmatprep.subr.bf16.mxu0 0
    %592 = vmatpush1.bf16.msra.mxu0 0
    %593 = vmatprep.subr.bf16.mxu0 0
    %594 = vmatpush1.bf16.msra.mxu0 0
    %595 = vmatprep.subr.bf16.mxu0 0
    %596 = vmatpush1.bf16.msra.mxu0 0
    %597 = vmatprep.subr.bf16.mxu0 0
    %598 = vmatpush1.bf16.msra.mxu0 0
    %599 = vmatprep.subr.bf16.mxu0 0
    %600 = vmatpush1.bf16.msra.mxu0 0
    %601 = vmatprep.subr.bf16.mxu0 0
    %602 = vmatpush1.bf16.msra.mxu0 0
    %603 = vmatprep.subr.bf16.mxu0 0
    %604 = vmatpush1.bf16.msra.mxu0 0
    %605 = vmatprep.mubr.bf16.mxu0 0
    %606 = vmatmul.mubr.bf16.gmra.mrb[0].mxu0 %v49
    %v607 = vpop.f32.mrb[0].mxu0
    %v608 = vadd.f32 %v565, %v607
    %v609 = vpop.f32.mrb[0].mxu0
    %v610 = vadd.f32 %v567, %v609
    %v611 = vpop.f32.mrb[0].mxu0
    %v612 = vadd.f32 %v569, %v611
    %v613 = vpop.f32.mrb[0].mxu0
    %v614 = vadd.f32 %v571, %v613
    %615 = vdwg.mxu0
    %616 = vmatprep.subr.bf16.mxu0 0
    %617 = vmatpush1.bf16.msra.mxu0 %v388
    %618 = vmatprep.subr.bf16.mxu0 0
    %619 = vmatpush1.bf16.msra.mxu0 %v391
    %620 = vmatprep.subr.bf16.mxu0 0
    %621 = vmatpush1.bf16.msra.mxu0 %v394
    %622 = vmatprep.subr.bf16.mxu0 0
    %623 = vmatpush1.bf16.msra.mxu0 %v397
    %624 = vmatprep.subr.bf16.mxu0 0
    %625 = vmatpush1.bf16.msra.mxu0 %v400
    %626 = vmatprep.subr.bf16.mxu0 0
    %627 = vmatpush1.bf16.msra.mxu0 %v403
    %628 = vmatprep.subr.bf16.mxu0 0
    %629 = vmatpush1.bf16.msra.mxu0 %v406
    %630 = vmatprep.subr.bf16.mxu0 0
    %631 = vmatpush1.bf16.msra.mxu0 %v409
    %632 = vmatprep.subr.bf16.mxu0 0
    %633 = vmatpush1.bf16.msra.mxu0 %v412
    %634 = vmatprep.subr.bf16.mxu0 0
    %635 = vmatpush1.bf16.msra.mxu0 %v415
    %636 = vmatprep.subr.bf16.mxu0 0
    %637 = vmatpush1.bf16.msra.mxu0 %v418
    %638 = vmatprep.subr.bf16.mxu0 0
    %639 = vmatpush1.bf16.msra.mxu0 %v421
    %640 = vmatprep.subr.bf16.mxu0 0
    %641 = vmatpush1.bf16.msra.mxu0 %v424
    %642 = vmatprep.subr.bf16.mxu0 0
    %643 = vmatpush1.bf16.msra.mxu0 %v427
    %644 = vmatprep.subr.bf16.mxu0 0
    %645 = vmatpush1.bf16.msra.mxu0 %v430
    %646 = vmatprep.subr.bf16.mxu0 0
    %647 = vmatpush1.bf16.msra.mxu0 %v433
    %648 = vmatprep.mubr.bf16.mxu0 %v48
    %649 = vmatmul.mubr.bf16.gmra.mrb[0].mxu0 %v47
    %v650 = vpop.f32.mrb[0].mxu0
    %v651 = vadd.f32 0.0, %v650
    %v652 = vpop.f32.mrb[0].mxu0
    %v653 = vpop.f32.mrb[0].mxu0
    %v654 = vadd.f32 0.0, %v653
    %v655 = vpop.f32.mrb[0].mxu0
    %656 = vdwg.mxu0
    %657 = vmatprep.subr.bf16.mxu0 0
    %658 = vmatpush1.bf16.msra.mxu0 %v436
    %659 = vmatprep.subr.bf16.mxu0 0
    %660 = vmatpush1.bf16.msra.mxu0 %v439
    %661 = vmatprep.subr.bf16.mxu0 0
    %662 = vmatpush1.bf16.msra.mxu0 %v442
    %663 = vmatprep.subr.bf16.mxu0 0
    %664 = vmatpush1.bf16.msra.mxu0 %v445
    %665 = vmatprep.subr.bf16.mxu0 0
    %666 = vmatpush1.bf16.msra.mxu0 %v448
    %667 = vmatprep.subr.bf16.mxu0 0
    %668 = vmatpush1.bf16.msra.mxu0 %v451
    %669 = vmatprep.subr.bf16.mxu0 0
    %670 = vmatpush1.bf16.msra.mxu0 %v454
    %671 = vmatprep.subr.bf16.mxu0 0
    %672 = vmatpush1.bf16.msra.mxu0 %v457
    %673 = vmatprep.subr.bf16.mxu0 0
    %674 = vmatpush1.bf16.msra.mxu0 0
    %675 = vmatprep.subr.bf16.mxu0 0
    %676 = vmatpush1.bf16.msra.mxu0 0
    %677 = vmatprep.subr.bf16.mxu0 0
    %678 = vmatpush1.bf16.msra.mxu0 0
    %679 = vmatprep.subr.bf16.mxu0 0
    %680 = vmatpush1.bf16.msra.mxu0 0
    %681 = vmatprep.subr.bf16.mxu0 0
    %682 = vmatpush1.bf16.msra.mxu0 0
    %683 = vmatprep.subr.bf16.mxu0 0
    %684 = vmatpush1.bf16.msra.mxu0 0
    %685 = vmatprep.subr.bf16.mxu0 0
    %686 = vmatpush1.bf16.msra.mxu0 0
    %687 = vmatprep.subr.bf16.mxu0 0
    %688 = vmatpush1.bf16.msra.mxu0 0
    %689 = vmatprep.mubr.bf16.mxu0 0
    %690 = vmatmul.mubr.bf16.gmra.mrb[0].mxu0 %v49
    %v691 = vpop.f32.mrb[0].mxu0
    %v692 = vadd.f32 %v651, %v691
    %v693 = vpop.f32.mrb[0].mxu0
    %v694 = vpop.f32.mrb[0].mxu0
    %v695 = vadd.f32 %v654, %v694
    %v696 = vpop.f32.mrb[0].mxu0
    %697 = vdwg.mxu0
    %v698 = vlaneseq
    %v699 = vshrl.u32 %v698, 7
    %v700 = vlaneseq
    %v701 = vand.u32 %v700, 127
    %vm702 = vcmp.le.s32.totalorder %v701, %v699
    %v703 = vpack.c.bf16 %v608, %v608
    %v704 = vpack.c.bf16 %v610, %v610
    %v705 = vpack.c.bf16 %v692, %v692
    %706 = vmatprep.subr.bf16.mxu0 0
    %707 = vmatpush1.bf16.xpose.msra.mxu0 %v703
    %708 = vmatprep.subr.bf16.mxu0 0
    %709 = vmatpush1.bf16.xpose.msra.mxu0 0
    %710 = vmatprep.subr.bf16.mxu0 0
    %711 = vmatpush1.bf16.xpose.msra.mxu0 0
    %712 = vmatprep.subr.bf16.mxu0 0
    %713 = vmatpush1.bf16.xpose.msra.mxu0 0
    %714 = vmatprep.subr.bf16.mxu0 0
    %715 = vmatpush1.bf16.xpose.msra.mxu0 0
    %716 = vmatprep.subr.bf16.mxu0 0
    %717 = vmatpush1.bf16.xpose.msra.mxu0 0
    %718 = vmatprep.subr.bf16.mxu0 0
    %719 = vmatpush1.bf16.xpose.msra.mxu0 0
    %720 = vmatprep.subr.bf16.mxu0 0
    %721 = vmatpush1.bf16.xpose.msra.mxu0 0
    %722 = vmatprep.subr.bf16.mxu0 0
    %723 = vmatpush1.bf16.xpose.msra.mxu0 0
    %724 = vmatprep.subr.bf16.mxu0 0
    %725 = vmatpush1.bf16.xpose.msra.mxu0 0
    %726 = vmatprep.subr.bf16.mxu0 0
    %727 = vmatpush1.bf16.xpose.msra.mxu0 0
    %728 = vmatprep.subr.bf16.mxu0 0
    %729 = vmatpush1.bf16.xpose.msra.mxu0 0
    %730 = vmatprep.subr.bf16.mxu0 0
    %731 = vmatpush1.bf16.xpose.msra.mxu0 0
    %732 = vmatprep.subr.bf16.mxu0 0
    %733 = vmatpush1.bf16.xpose.msra.mxu0 0
    %734 = vmatprep.subr.bf16.mxu0 0
    %735 = vmatpush1.bf16.xpose.msra.mxu0 0
    %736 = vmatprep.subr.bf16.mxu0 0
    %737 = vmatpush1.bf16.xpose.msra.mxu0 0
    %738 = vmatprep.mubr.bf16.mxu0 0
    %739 = vmatmul.mubr.bf16.gmra.mrb[0].mxu0 %v704
    %v740 = vpop.f32.mrb[0].mxu0
    %v741 = vadd.f32 0.0, %v740
    %v742 = vpop.f32.mrb[0].mxu0
    %v743 = vpop.f32.mrb[0].mxu0
    %v744 = vpop.f32.mrb[0].mxu0
    %745 = vdwg.mxu0
    %v746 = vmul.f32 %v741, 0.125
    %v747 = vsel %vm702, %v746, -inf
    %vm748 = vcmask 64512
    %v749 = vsel %vm748, %v747, -inf
    %750 = vmax.xlane.f32.xlu0 %v749
    %v751 = vpop.xlane.xlu0 %750
    %v752 = vsub.f32 %v747, %v751
    %v753 = vmul.f32 %v752, 1.442695
    %v754 = vpow.pop %v753
    %v755 = vsel %vm748, %v754, 0.0
    %756 = vadd.xlane.f32.xlu0 %v755
    %v757 = vpop.xlane.xlu0 %756
    %v758 = vrcp.pop %v757
    %v759 = vmul.f32 %v754, %v758
    %v760 = vpack.c.bf16 %v759, %v759
    %v762 = vsel %vm748, %v760, 0
    %vm764 = vcmask 1043456
    %v766 = vsel %vm764, %v705, 0
    %768 = vmatprep.subr.bf16.mxu0 0
    %769 = vmatpush1.bf16.msra.mxu0 %v766
    %770 = vmatprep.subr.bf16.mxu0 0
    %771 = vmatpush1.bf16.msra.mxu0 0
    %772 = vmatprep.subr.bf16.mxu0 0
    %773 = vmatpush1.bf16.msra.mxu0 0
    %774 = vmatprep.subr.bf16.mxu0 0
    %775 = vmatpush1.bf16.msra.mxu0 0
    %776 = vmatprep.subr.bf16.mxu0 0
    %777 = vmatpush1.bf16.msra.mxu0 0
    %778 = vmatprep.subr.bf16.mxu0 0
    %779 = vmatpush1.bf16.msra.mxu0 0
    %780 = vmatprep.subr.bf16.mxu0 0
    %781 = vmatpush1.bf16.msra.mxu0 0
    %782 = vmatprep.subr.bf16.mxu0 0
    %783 = vmatpush1.bf16.msra.mxu0 0
    %784 = vmatprep.subr.bf16.mxu0 0
    %785 = vmatpush1.bf16.msra.mxu0 0
    %786 = vmatprep.subr.bf16.mxu0 0
    %787 = vmatpush1.bf16.msra.mxu0 0
    %788 = vmatprep.subr.bf16.mxu0 0
    %789 = vmatpush1.bf16.msra.mxu0 0
    %790 = vmatprep.subr.bf16.mxu0 0
    %791 = vmatpush1.bf16.msra.mxu0 0
    %792 = vmatprep.subr.bf16.mxu0 0
    %793 = vmatpush1.bf16.msra.mxu0 0
    %794 = vmatprep.subr.bf16.mxu0 0
    %795 = vmatpush1.bf16.msra.mxu0 0
    %796 = vmatprep.subr.bf16.mxu0 0
    %797 = vmatpush1.bf16.msra.mxu0 0
    %798 = vmatprep.subr.bf16.mxu0 0
    %799 = vmatpush1.bf16.msra.mxu0 0
    %800 = vmatprep.mubr.bf16.mxu0 0
    %801 = vmatmul.mubr.bf16.gmra.mrb[0].mxu0 %v762
    %v802 = vpop.f32.mrb[0].mxu0
    %v803 = vadd.f32 0.0, %v802
    %v804 = vpop.f32.mrb[0].mxu0
    %v805 = vpop.f32.mrb[0].mxu0
    %v806 = vpop.f32.mrb[0].mxu0
    %807 = vdwg.mxu0
    %808 = vst [vmem:[#allocation7] sm:$0xff] %v803
    %v809 = vpack.c.bf16 %v612, %v612
    %v810 = vpack.c.bf16 %v614, %v614
    %v811 = vpack.c.bf16 %v695, %v695
    %812 = vmatprep.subr.bf16.mxu0 0
    %813 = vmatpush1.bf16.xpose.msra.mxu0 %v809
    %814 = vmatprep.subr.bf16.mxu0 0
    %815 = vmatpush1.bf16.xpose.msra.mxu0 0
    %816 = vmatprep.subr.bf16.mxu0 0
    %817 = vmatpush1.bf16.xpose.msra.mxu0 0
    %818 = vmatprep.subr.bf16.mxu0 0
    %819 = vmatpush1.bf16.xpose.msra.mxu0 0
    %820 = vmatprep.subr.bf16.mxu0 0
    %821 = vmatpush1.bf16.xpose.msra.mxu0 0
    %822 = vmatprep.subr.bf16.mxu0 0
    %823 = vmatpush1.bf16.xpose.msra.mxu0 0
    %824 = vmatprep.subr.bf16.mxu0 0
    %825 = vmatpush1.bf16.xpose.msra.mxu0 0
    %826 = vmatprep.subr.bf16.mxu0 0
    %827 = vmatpush1.bf16.xpose.msra.mxu0 0
    %828 = vmatprep.subr.bf16.mxu0 0
    %829 = vmatpush1.bf16.xpose.msra.mxu0 0
    %830 = vmatprep.subr.bf16.mxu0 0
    %831 = vmatpush1.bf16.xpose.msra.mxu0 0
    %832 = vmatprep.subr.bf16.mxu0 0
    %833 = vmatpush1.bf16.xpose.msra.mxu0 0
    %834 = vmatprep.subr.bf16.mxu0 0
    %835 = vmatpush1.bf16.xpose.msra.mxu0 0
    %836 = vmatprep.subr.bf16.mxu0 0
    %837 = vmatpush1.bf16.xpose.msra.mxu0 0
    %838 = vmatprep.subr.bf16.mxu0 0
    %839 = vmatpush1.bf16.xpose.msra.mxu0 0
    %840 = vmatprep.subr.bf16.mxu0 0
    %841 = vmatpush1.bf16.xpose.msra.mxu0 0
    %842 = vmatprep.subr.bf16.mxu0 0
    %843 = vmatpush1.bf16.xpose.msra.mxu0 0
    %844 = vmatprep.mubr.bf16.mxu0 0
    %845 = vmatmul.mubr.bf16.gmra.mrb[0].mxu0 %v810
    %v846 = vpop.f32.mrb[0].mxu0
    %v847 = vadd.f32 0.0, %v846
    %v848 = vpop.f32.mrb[0].mxu0
    %v849 = vpop.f32.mrb[0].mxu0
    %v850 = vpop.f32.mrb[0].mxu0
    %851 = vdwg.mxu0
    %v852 = vmul.f32 %v847, 0.125
    %v853 = vsel %vm702, %v852, -inf
    %v854 = vsel %vm748, %v853, -inf
    %855 = vmax.xlane.f32.xlu0 %v854
    %v856 = vpop.xlane.xlu0 %855
    %v857 = vsub.f32 %v853, %v856
    %v858 = vmul.f32 %v857, 1.442695
    %v859 = vpow.pop %v858
    %v860 = vsel %vm748, %v859, 0.0
    %861 = vadd.xlane.f32.xlu0 %v860
    %v862 = vpop.xlane.xlu0 %861
    %v863 = vrcp.pop %v862
    %v864 = vmul.f32 %v859, %v863
    %v865 = vpack.c.bf16 %v864, %v864
    %v867 = vsel %vm748, %v865, 0
    %v870 = vsel %vm764, %v811, 0
    %872 = vmatprep.subr.bf16.mxu0 0
    %873 = vmatpush1.bf16.msra.mxu0 %v870
    %874 = vmatprep.subr.bf16.mxu0 0
    %875 = vmatpush1.bf16.msra.mxu0 0
    %876 = vmatprep.subr.bf16.mxu0 0
    %877 = vmatpush1.bf16.msra.mxu0 0
    %878 = vmatprep.subr.bf16.mxu0 0
    %879 = vmatpush1.bf16.msra.mxu0 0
    %880 = vmatprep.subr.bf16.mxu0 0
    %881 = vmatpush1.bf16.msra.mxu0 0
    %882 = vmatprep.subr.bf16.mxu0 0
    %883 = vmatpush1.bf16.msra.mxu0 0
    %884 = vmatprep.subr.bf16.mxu0 0
    %885 = vmatpush1.bf16.msra.mxu0 0
    %886 = vmatprep.subr.bf16.mxu0 0
    %887 = vmatpush1.bf16.msra.mxu0 0
    %888 = vmatprep.subr.bf16.mxu0 0
    %889 = vmatpush1.bf16.msra.mxu0 0
    %890 = vmatprep.subr.bf16.mxu0 0
    %891 = vmatpush1.bf16.msra.mxu0 0
    %892 = vmatprep.subr.bf16.mxu0 0
    %893 = vmatpush1.bf16.msra.mxu0 0
    %894 = vmatprep.subr.bf16.mxu0 0
    %895 = vmatpush1.bf16.msra.mxu0 0
    %896 = vmatprep.subr.bf16.mxu0 0
    %897 = vmatpush1.bf16.msra.mxu0 0
    %898 = vmatprep.subr.bf16.mxu0 0
    %899 = vmatpush1.bf16.msra.mxu0 0
    %900 = vmatprep.subr.bf16.mxu0 0
    %901 = vmatpush1.bf16.msra.mxu0 0
    %902 = vmatprep.subr.bf16.mxu0 0
    %903 = vmatpush1.bf16.msra.mxu0 0
    %904 = vmatprep.mubr.bf16.mxu0 0
    %905 = vmatmul.mubr.bf16.gmra.mrb[0].mxu0 %v867
    %v906 = vpop.f32.mrb[0].mxu0
    %v907 = vadd.f32 0.0, %v906
    %v908 = vpop.f32.mrb[0].mxu0
    %v909 = vpop.f32.mrb[0].mxu0
    %v910 = vpop.f32.mrb[0].mxu0
    %911 = vdwg.mxu0
    %912 = vst [vmem:[#allocation7 + $0x8] sm:$0xff] %v907
    // Predicated region
    $region18: #{tpu_custom_call.1} parent=1 // pred_check
      _
    $region19: #{tpu_custom_call.1} parent=1 // pred_check_branch
      %914 = sbr.rel (0) target = $region21
    $region20: #{tpu_custom_call.1} parent=1 // pred_region
      %s916 = ssub.s32 256, 256
      %917 = vsyncadd [#allocation4], %s916
      %s918 = sshll.u32 [#allocation7], 4
      %s919 = int_to_ptr.vmem [resolvable:$true] %s918
      %924 = dma.vmem_to_hbm [thread:$0]  %s919, 256, %s2, [#allocation4], 128, 128, 8
    $region21: #{tpu_custom_call.1} parent=1 // pred_fallthru
      _
    // Predicated region
    $region22: #{tpu_custom_call.1} parent=1 // pred_check
      _
    $region23: #{tpu_custom_call.1} parent=1 // pred_check_branch
      %926 = sbr.rel (0) target = $region25
    $region24: #{tpu_custom_call.1} parent=1 // pred_region
      %927 = dma.done [#allocation4], 256
    $region25: #{tpu_custom_call.1} parent=1 // pred_fallthru
      _
    %928 = vsyncpa [#allocation3], 1
    %929 = vsyncpa [#allocation6], 1
    %930 = vsyncpa [#allocation4], 1

</llo_original>
